<compile_context>
chip_gen: v7x
topology: tpu7x:2x2x1
jax: 0.10.0
libtpu: 0.0.40
codegen_flags: <defaults>
</compile_context>

<pallas_src>
from dataclasses import dataclass

import jax
import jax.numpy as jnp
from jax.experimental import pallas as pl
from jax.experimental.pallas import tpu as pltpu


def _round_up(x, m):
    return ((x + m - 1) // m) * m


def _cdiv(a, b):
    return -(-a // b)


def _num_tensorcores():
    """Best-effort TensorCore-per-device count (v7x / megacore -> 2, else 1)."""
    try:
        dev = jax.devices()[0]
        n = getattr(dev, "num_cores", None)
        if n:
            return int(n)
        kind = str(getattr(dev, "device_kind", "")).lower()
        if any(tag in kind for tag in ("v4", "v5p", "v7", "7x")):
            return 2
    except Exception:  # pragma: no cover - defensive
        pass
    return 1


@dataclass(frozen=True)
class _Plan:
    P: int        # batch rows packed per 128-lane vreg row
    W: int        # packed row width = P * D
    TP: int       # packed rows per grid step
    grid: int
    Bp_pad: int   # padded packed-row count
    B_pad: int    # padded original-row count


def _plan(B, D, *, max_tile_packed, num_cores):
    P = 128 // D if (D < 128 and 128 % D == 0) else 1
    W = P * D
    Bp = _cdiv(B, P)
    TP = min(max_tile_packed, _round_up(Bp, 8))
    if num_cores > 1 and Bp <= TP and TP >= 16:
        # Only split a single-step grid when there really are >=2 TensorCores
        # to feed; on 1-TC chips the split is just extra per-step overhead.
        TP = _round_up(_cdiv(Bp, num_cores), 8)
    Bp_pad = _round_up(Bp, TP)
    return _Plan(P=P, W=W, TP=TP, grid=Bp_pad // TP, Bp_pad=Bp_pad,
                 B_pad=Bp_pad * P)


def convkb_kernel(h_ref, r_ref, t_ref, convw_ref, convb_ref, wfc_ref, fcb_ref,
                  out_ref):
    cdt = h_ref.dtype                       # compute dtype == input dtype
    C = convb_ref.shape[0]

    # Hoist all SMEM scalar reads; cast once to the compute dtype so bf16
    # inputs keep the whole conv chain on the bf16 VALU (v6e/v7x).
    w0 = [convw_ref[c, 0].astype(cdt) for c in range(C)]
    w1 = [convw_ref[c, 1].astype(cdt) for c in range(C)]
    w2 = [convw_ref[c, 2].astype(cdt) for c in range(C)]
    cb = [convb_ref[c].astype(cdt) for c in range(C)]
    fcb = fcb_ref[0]                        # f32 scalar

    h = h_ref[...]                          # (TP, W), packed: P rows / vreg row
    r = r_ref[...]
    t = t_ref[...]

    # Conv2d(1, C, (1, 3)) + bias + ReLU per channel on the VPU (dropout is
    # identity at inference).  C is small & static -> unrolled.
    xs = [jnp.maximum(w0[c] * h + w1[c] * r + w2[c] * t + cb[c], 0).astype(cdt)
          for c in range(C)]

    # Lane-group-aligned concat -> ONE MXU matmul against the block-diagonal
    # (C*W, P) fc weight (fc layer baked in), f32 accumulation.  Replaces C
    # small dots + a lane-sparse (TP, P) read-modify-write accumulator.
    x = jnp.concatenate(xs, axis=-1)        # (TP, C*W)
    out_ref[...] = (jnp.dot(x, wfc_ref[...], preferred_element_type=jnp.float32)
                    + fcb)


def _convkb_packed(h_pk, r_pk, t_pk, conv_w2d, conv_b, fc_w_flat, fc_b,
                   *, P, W, TP):
    """Run ConvKB on already packed (Bp_pad, W) slabs.  Returns (Bp_pad, P) f32."""
    Bp_pad = h_pk.shape[0]
    grid = Bp_pad // TP
    C = conv_w2d.shape[0]
    D = W // P
    cdt = h_pk.dtype

    # Block-diagonal fc weight: wfc[c*W + j*D + d, j] = fc_w[c*D + d]
    fc_w2d = fc_w_flat.reshape(C, D).astype(jnp.float32)
    eye_p = jnp.eye(P, dtype=jnp.float32)
    wfc = (fc_w2d[:, None, :, None] * eye_p[None, :, None, :]
           ).reshape(C * W, P).astype(cdt)

    emb_spec = pl.BlockSpec((TP, W), lambda i: (i, 0))
    smem_spec = pl.BlockSpec(memory_space=pltpu.MemorySpace.SMEM)

    return pl.pallas_call(
        convkb_kernel,
        out_shape=jax.ShapeDtypeStruct((Bp_pad, P), jnp.float32),
        grid_spec=pltpu.PrefetchScalarGridSpec(
            num_scalar_prefetch=0,
            grid=(grid,),
            in_specs=[
                emb_spec,                                        # packed head emb
                emb_spec,                                        # packed relation emb
                emb_spec,                                        # packed tail emb
                smem_spec,                                       # conv weight (C, 3)
                smem_spec,                                       # conv bias (C,)
                pl.BlockSpec((C * W, P), lambda i: (0, 0)),      # block-diag fc weight
                smem_spec,                                       # fc bias (1,)
            ],
            out_specs=pl.BlockSpec((TP, P), lambda i: (i, 0)),
        ),
        compiler_params=pltpu.CompilerParams(
            dimension_semantics=("parallel",),
            # ~26 MiB peak at TP=4096 bf16; keep the cap <= v7x's 64 MiB.
            vmem_limit_bytes=48 * 1024 * 1024),
    )(h_pk, r_pk, t_pk, conv_w2d.astype(jnp.float32),
      conv_b.astype(jnp.float32), wfc, fc_b.astype(jnp.float32))


def convkb_forward(h, r, t, conv_w2d, conv_b, fc_w_flat, fc_b, *,
                   max_tile_packed=None, num_cores=None):
    """h, r, t: (B, D).  conv_w2d: (C, 3).  conv_b: (C,).
    fc_w_flat: (C*D,) in PyTorch's channel-major (c*D + d) flatten order.
    fc_b: (1,).  Returns (B, 1) float32 scores."""
    B, D = h.shape
    if max_tile_packed is None:
        max_tile_packed = 4096 if h.dtype.itemsize <= 2 else 2048
    if num_cores is None:
        num_cores = _num_tensorcores()
    plan = _plan(B, D, max_tile_packed=max_tile_packed, num_cores=num_cores)

    if plan.B_pad != B:
        # Fallback only (direct callers with unaligned B).  The fused wrapper
        # below pads the tiny index array instead so this copy never happens.
        pad = ((0, plan.B_pad - B), (0, 0))
        h, r, t = jnp.pad(h, pad), jnp.pad(r, pad), jnp.pad(t, pad)

    h_pk = h.reshape(plan.Bp_pad, plan.W)       # free row-major re-view
    r_pk = r.reshape(plan.Bp_pad, plan.W)
    t_pk = t.reshape(plan.Bp_pad, plan.W)

    out = _convkb_packed(h_pk, r_pk, t_pk, conv_w2d, conv_b, fc_w_flat, fc_b,
                         P=plan.P, W=plan.W, TP=plan.TP)
    # (Bp_pad, P) row-major flatten == per-original-row scores; drop padding.
    return out.reshape(plan.B_pad, 1)[:B]


def spkbgat_conv_only_forward(final_entity_embeddings, final_relation_embeddings,
                              conv_w, conv_b, fc_w, fc_b, batch_inputs,
                              *, param_dtype=jnp.bfloat16):
    """Forward of SpKBGATConvOnly (Corpus_/adj are unused by the module).

    param_dtype controls the precision of the gathered h/r/t slabs the kernel
    streams from HBM (bf16 default: half the traffic, f32 accumulation inside).
    Pass jnp.float32 for bit-faithful f32 semantics."""
    B = batch_inputs.shape[0]
    D = final_entity_embeddings.shape[1]
    C = conv_w.shape[0]

    max_tp = 4096 if jnp.dtype(param_dtype).itemsize <= 2 else 2048
    num_cores = _num_tensorcores()
    plan = _plan(B, D, max_tile_packed=max_tp, num_cores=num_cores)

    # Pad the tiny (B, 3) index array (not the big gathered slabs) so the
    # gather directly emits tile-aligned (B_pad, D) arrays.
    idx = batch_inputs.astype(jnp.int32)
    if plan.B_pad != B:
        idx = jnp.concatenate(
            [idx, jnp.zeros((plan.B_pad - B, idx.shape[1]), jnp.int32)], axis=0)

    # Embedding gather == torch.cat of the three unsqueezed lookups; the
    # gather + downcast fuse in XLA so the materialized slabs are param_dtype.
    # TODO(synk): fuse the gather itself into the kernel (scalar-prefetched
    # indices + VMEM-resident tables) to drop the HBM round trip; kept in XLA
    # because arbitrary-row in-kernel gathers over large tables do not lower
    # robustly on TPU.
    h = final_entity_embeddings[idx[:, 0]].astype(param_dtype)   # (B_pad, D)
    r = final_relation_embeddings[idx[:, 1]].astype(param_dtype)
    t = final_entity_embeddings[idx[:, 2]].astype(param_dtype)

    conv_w2d = conv_w.reshape(C, 3)
    # out_conv.squeeze(-1).view(B, C*D) flattens channel-major (c*D + d),
    # matching fc_w.reshape(-1) directly.
    out = convkb_forward(h, r, t, conv_w2d, conv_b, fc_w.reshape(-1), fc_b,
                         max_tile_packed=max_tp, num_cores=num_cores)
    return out[:B]


if __name__ == "__main__":
    key = jax.random.PRNGKey(0)

    # Shapes implied by the module: D = entity_out_dim_1 * nheads_GAT_1.
    num_nodes, num_rel = 32, 10
    entity_out_dim = [8, 16]
    nheads_GAT = [4, 2]
    D = entity_out_dim[0] * nheads_GAT[0]   # 32
    C = 4                                   # conv_out_channels

    k1, k2, k3, k4, k5, k6, k7 = jax.random.split(key, 7)
    final_entity_embeddings = jax.random.normal(k1, (num_nodes, D), jnp.float32)
    final_relation_embeddings = jax.random.normal(k2, (num_rel, D), jnp.float32)
    conv_w = jax.random.normal(k3, (C, 1, 1, 3), jnp.float32) * 0.1  # Conv2d(1, C, (1,3))
    conv_b = jax.random.normal(k4, (C,), jnp.float32) * 0.1
    fc_w = jax.random.normal(k5, (1, C * D), jnp.float32) * 0.1      # Linear(C*D, 1)
    fc_b = jax.random.normal(k6, (1,), jnp.float32) * 0.1

    def reference(batch_inputs):
        h = final_entity_embeddings[batch_inputs[:, 0]]
        r = final_relation_embeddings[batch_inputs[:, 1]]
        t = final_entity_embeddings[batch_inputs[:, 2]]
        cw = conv_w.reshape(C, 3)
        x = (cw[None, :, 0:1] * h[:, None, :]
             + cw[None, :, 1:2] * r[:, None, :]
             + cw[None, :, 2:3] * t[:, None, :]
             + conv_b[None, :, None])                   # (B, C, D)
        x = jnp.maximum(x, 0.0).reshape(batch_inputs.shape[0], C * D)
        return x @ fc_w.T + fc_b                        # (B, 1)

    for B in (8, 1000):   # tiny batch + a non-multiple batch (exercises padding)
        kk = jax.random.fold_in(k7, B)
        heads = jax.random.randint(kk, (B,), 0, num_nodes)
        rels = jax.random.randint(jax.random.fold_in(kk, 1), (B,), 0, num_rel)
        tails = jax.random.randint(jax.random.fold_in(kk, 2), (B,), 0, num_nodes)
        batch_inputs = jnp.stack([heads, rels, tails], axis=1).astype(jnp.int32)
        ref = reference(batch_inputs)

        # 1) Bit-faithful f32 path: must match the reference tightly.
        out_f32 = jax.block_until_ready(
            spkbgat_conv_only_forward(final_entity_embeddings,
                                      final_relation_embeddings,
                                      conv_w, conv_b, fc_w, fc_b, batch_inputs,
                                      param_dtype=jnp.float32))
        assert out_f32.shape == (B, 1) and out_f32.dtype == jnp.float32
        assert jnp.allclose(out_f32, ref, atol=1e-4, rtol=1e-4), (
            float(jnp.max(jnp.abs(out_f32 - ref))))

        # 2) Default bf16 fast path: same semantics, bf16 input rounding only.
        out_bf16 = jax.block_until_ready(
            spkbgat_conv_only_forward(final_entity_embeddings,
                                      final_relation_embeddings,
                                      conv_w, conv_b, fc_w, fc_b, batch_inputs))
        assert out_bf16.shape == (B, 1) and out_bf16.dtype == jnp.float32
        assert jnp.allclose(out_bf16, ref, atol=5e-2, rtol=5e-2), (
            float(jnp.max(jnp.abs(out_bf16 - ref))))

    print("KERNEL_OK")
</pallas_src>

<mosaic_0001>
module attributes {stable_mosaic.version = 11 : i64} {
  func.func @convkb_kernel(%arg0: i32, %arg1: memref<8x128xf32, #tpu.memory_space<vmem>>, %arg2: memref<8x128xf32, #tpu.memory_space<vmem>>, %arg3: memref<8x128xf32, #tpu.memory_space<vmem>>, %arg4: memref<4x3xf32, #tpu.memory_space<smem>>, %arg5: memref<4xf32, #tpu.memory_space<smem>>, %arg6: memref<512x4xf32, #tpu.memory_space<vmem>>, %arg7: memref<1xf32, #tpu.memory_space<smem>>, %arg8: memref<8x4xf32, #tpu.memory_space<vmem>>) attributes {dimension_semantics = [#tpu.dimension_semantics<parallel>], iteration_bounds = array<i64: 1>, scalar_prefetch = 0 : i64, scratch_operands = 0 : i64, tpu.core_type = #tpu.core_type<tc>, window_params = [{transform_indices = @transform_0, window_bounds = array<i64: 8, 128>}, {transform_indices = @transform_1, window_bounds = array<i64: 8, 128>}, {transform_indices = @transform_2, window_bounds = array<i64: 8, 128>}, {transform_indices = @transform_3, window_bounds = array<i64: 4, 3>}, {transform_indices = @transform_4, window_bounds = array<i64: 4>}, {pipeline_mode = #tpu.pipeline_mode<synchronous>, transform_indices = @transform_5, window_bounds = array<i64: 512, 4>}, {transform_indices = @transform_6, window_bounds = array<i64: 1>}, {transform_indices = @transform_7, window_bounds = array<i64: 8, 4>}]} {
    %c0 = arith.constant 0 : index
    %c0_0 = arith.constant 0 : index
    %0 = memref.load %arg4[%c0, %c0_0] : memref<4x3xf32, #tpu.memory_space<smem>>
    %c1 = arith.constant 1 : index
    %c0_1 = arith.constant 0 : index
    %1 = memref.load %arg4[%c1, %c0_1] : memref<4x3xf32, #tpu.memory_space<smem>>
    %c2 = arith.constant 2 : index
    %c0_2 = arith.constant 0 : index
    %2 = memref.load %arg4[%c2, %c0_2] : memref<4x3xf32, #tpu.memory_space<smem>>
    %c3 = arith.constant 3 : index
    %c0_3 = arith.constant 0 : index
    %3 = memref.load %arg4[%c3, %c0_3] : memref<4x3xf32, #tpu.memory_space<smem>>
    %c0_4 = arith.constant 0 : index
    %c1_5 = arith.constant 1 : index
    %4 = memref.load %arg4[%c0_4, %c1_5] : memref<4x3xf32, #tpu.memory_space<smem>>
    %c1_6 = arith.constant 1 : index
    %c1_7 = arith.constant 1 : index
    %5 = memref.load %arg4[%c1_6, %c1_7] : memref<4x3xf32, #tpu.memory_space<smem>>
    %c2_8 = arith.constant 2 : index
    %c1_9 = arith.constant 1 : index
    %6 = memref.load %arg4[%c2_8, %c1_9] : memref<4x3xf32, #tpu.memory_space<smem>>
    %c3_10 = arith.constant 3 : index
    %c1_11 = arith.constant 1 : index
    %7 = memref.load %arg4[%c3_10, %c1_11] : memref<4x3xf32, #tpu.memory_space<smem>>
    %c0_12 = arith.constant 0 : index
    %c2_13 = arith.constant 2 : index
    %8 = memref.load %arg4[%c0_12, %c2_13] : memref<4x3xf32, #tpu.memory_space<smem>>
    %c1_14 = arith.constant 1 : index
    %c2_15 = arith.constant 2 : index
    %9 = memref.load %arg4[%c1_14, %c2_15] : memref<4x3xf32, #tpu.memory_space<smem>>
    %c2_16 = arith.constant 2 : index
    %c2_17 = arith.constant 2 : index
    %10 = memref.load %arg4[%c2_16, %c2_17] : memref<4x3xf32, #tpu.memory_space<smem>>
    %c3_18 = arith.constant 3 : index
    %c2_19 = arith.constant 2 : index
    %11 = memref.load %arg4[%c3_18, %c2_19] : memref<4x3xf32, #tpu.memory_space<smem>>
    %c0_20 = arith.constant 0 : index
    %12 = memref.load %arg5[%c0_20] : memref<4xf32, #tpu.memory_space<smem>>
    %c1_21 = arith.constant 1 : index
    %13 = memref.load %arg5[%c1_21] : memref<4xf32, #tpu.memory_space<smem>>
    %c2_22 = arith.constant 2 : index
    %14 = memref.load %arg5[%c2_22] : memref<4xf32, #tpu.memory_space<smem>>
    %c3_23 = arith.constant 3 : index
    %15 = memref.load %arg5[%c3_23] : memref<4xf32, #tpu.memory_space<smem>>
    %c0_24 = arith.constant 0 : index
    %16 = memref.load %arg7[%c0_24] : memref<1xf32, #tpu.memory_space<smem>>
    %c0_25 = arith.constant 0 : index
    %c0_26 = arith.constant 0 : index
    %17 = vector.load %arg1[%c0_25, %c0_26] : memref<8x128xf32, #tpu.memory_space<vmem>>, vector<8x128xf32>
    %c0_27 = arith.constant 0 : index
    %c0_28 = arith.constant 0 : index
    %18 = vector.load %arg2[%c0_27, %c0_28] : memref<8x128xf32, #tpu.memory_space<vmem>>, vector<8x128xf32>
    %c0_29 = arith.constant 0 : index
    %c0_30 = arith.constant 0 : index
    %19 = vector.load %arg3[%c0_29, %c0_30] : memref<8x128xf32, #tpu.memory_space<vmem>>, vector<8x128xf32>
    %20 = vector.broadcast %0 : f32 to vector<8x128xf32>
    %21 = arith.mulf %20, %17 : vector<8x128xf32>
    %22 = vector.broadcast %4 : f32 to vector<8x128xf32>
    %23 = arith.mulf %22, %18 : vector<8x128xf32>
    %24 = arith.addf %21, %23 : vector<8x128xf32>
    %25 = vector.broadcast %8 : f32 to vector<8x128xf32>
    %26 = arith.mulf %25, %19 : vector<8x128xf32>
    %27 = arith.addf %24, %26 : vector<8x128xf32>
    %28 = vector.broadcast %12 : f32 to vector<8x128xf32>
    %29 = arith.addf %27, %28 : vector<8x128xf32>
    %cst = arith.constant 0.000000e+00 : f32
    %30 = vector.broadcast %cst : f32 to vector<8x128xf32>
    %31 = arith.maximumf %29, %30 : vector<8x128xf32>
    %32 = vector.broadcast %1 : f32 to vector<8x128xf32>
    %33 = arith.mulf %32, %17 : vector<8x128xf32>
    %34 = vector.broadcast %5 : f32 to vector<8x128xf32>
    %35 = arith.mulf %34, %18 : vector<8x128xf32>
    %36 = arith.addf %33, %35 : vector<8x128xf32>
    %37 = vector.broadcast %9 : f32 to vector<8x128xf32>
    %38 = arith.mulf %37, %19 : vector<8x128xf32>
    %39 = arith.addf %36, %38 : vector<8x128xf32>
    %40 = vector.broadcast %13 : f32 to vector<8x128xf32>
    %41 = arith.addf %39, %40 : vector<8x128xf32>
    %cst_31 = arith.constant 0.000000e+00 : f32
    %42 = vector.broadcast %cst_31 : f32 to vector<8x128xf32>
    %43 = arith.maximumf %41, %42 : vector<8x128xf32>
    %44 = vector.broadcast %2 : f32 to vector<8x128xf32>
    %45 = arith.mulf %44, %17 : vector<8x128xf32>
    %46 = vector.broadcast %6 : f32 to vector<8x128xf32>
    %47 = arith.mulf %46, %18 : vector<8x128xf32>
    %48 = arith.addf %45, %47 : vector<8x128xf32>
    %49 = vector.broadcast %10 : f32 to vector<8x128xf32>
    %50 = arith.mulf %49, %19 : vector<8x128xf32>
    %51 = arith.addf %48, %50 : vector<8x128xf32>
    %52 = vector.broadcast %14 : f32 to vector<8x128xf32>
    %53 = arith.addf %51, %52 : vector<8x128xf32>
    %cst_32 = arith.constant 0.000000e+00 : f32
    %54 = vector.broadcast %cst_32 : f32 to vector<8x128xf32>
    %55 = arith.maximumf %53, %54 : vector<8x128xf32>
    %56 = vector.broadcast %3 : f32 to vector<8x128xf32>
    %57 = arith.mulf %56, %17 : vector<8x128xf32>
    %58 = vector.broadcast %7 : f32 to vector<8x128xf32>
    %59 = arith.mulf %58, %18 : vector<8x128xf32>
    %60 = arith.addf %57, %59 : vector<8x128xf32>
    %61 = vector.broadcast %11 : f32 to vector<8x128xf32>
    %62 = arith.mulf %61, %19 : vector<8x128xf32>
    %63 = arith.addf %60, %62 : vector<8x128xf32>
    %64 = vector.broadcast %15 : f32 to vector<8x128xf32>
    %65 = arith.addf %63, %64 : vector<8x128xf32>
    %cst_33 = arith.constant 0.000000e+00 : f32
    %66 = vector.broadcast %cst_33 : f32 to vector<8x128xf32>
    %67 = arith.maximumf %65, %66 : vector<8x128xf32>
    %68 = tpu.concatenate %31, %43, %55, %67 in 1 : vector<8x128xf32>, vector<8x128xf32>, vector<8x128xf32>, vector<8x128xf32> -> vector<8x512xf32>
    %c0_34 = arith.constant 0 : index
    %c0_35 = arith.constant 0 : index
    %69 = vector.load %arg6[%c0_34, %c0_35] : memref<512x4xf32, #tpu.memory_space<vmem>>, vector<512x4xf32>
    %cst_36 = arith.constant dense<0.000000e+00> : vector<8x4xf32>
    %70 = tpu.matmul %68, %69, %cst_36 {dimension_numbers = #tpu.dot_dimension_numbers<[1], [0], [0], [1], [0, 0, 1, 1], [], []>} : vector<8x512xf32>, vector<512x4xf32>, vector<8x4xf32> -> vector<8x4xf32>
    %71 = vector.broadcast %16 : f32 to vector<8x4xf32>
    %72 = arith.addf %70, %71 : vector<8x4xf32>
    %c0_37 = arith.constant 0 : index
    %c0_38 = arith.constant 0 : index
    %73 = vector.load %arg8[%c0_37, %c0_38] : memref<8x4xf32, #tpu.memory_space<vmem>>, vector<8x4xf32>
    tpu.vector_store %arg8[%c0_37, %c0_38], %72 {strides = array<i32>} : memref<8x4xf32, #tpu.memory_space<vmem>>, vector<8x4xf32>,
    return
  }
  func.func @transform_0(%arg0: i32) -> (i32, i32) {
    %c0_i32 = arith.constant 0 : i32
    %c0_i32_0 = arith.constant 0 : i32
    return %arg0, %c0_i32 : i32, i32
  }
  func.func @transform_1(%arg0: i32) -> (i32, i32) {
    %c0_i32 = arith.constant 0 : i32
    %c0_i32_0 = arith.constant 0 : i32
    return %arg0, %c0_i32 : i32, i32
  }
  func.func @transform_2(%arg0: i32) -> (i32, i32) {
    %c0_i32 = arith.constant 0 : i32
    %c0_i32_0 = arith.constant 0 : i32
    return %arg0, %c0_i32 : i32, i32
  }
  func.func @transform_3(%arg0: i32) -> (i32, i32) {
    %c0_i32 = arith.constant 0 : i32
    %c0_i32_0 = arith.constant 0 : i32
    %c0_i32_1 = arith.constant 0 : i32
    return %c0_i32, %c0_i32_0 : i32, i32
  }
  func.func @transform_4(%arg0: i32) -> i32 {
    %c0_i32 = arith.constant 0 : i32
    %c0_i32_0 = arith.constant 0 : i32
    return %c0_i32 : i32
  }
  func.func @transform_5(%arg0: i32) -> (i32, i32) {
    %c0_i32 = arith.constant 0 : i32
    %c0_i32_0 = arith.constant 0 : i32
    %c0_i32_1 = arith.constant 0 : i32
    return %c0_i32, %c0_i32_0 : i32, i32
  }
  func.func @transform_6(%arg0: i32) -> i32 {
    %c0_i32 = arith.constant 0 : i32
    %c0_i32_0 = arith.constant 0 : i32
    return %c0_i32 : i32
  }
  func.func @transform_7(%arg0: i32) -> (i32, i32) {
    %c0_i32 = arith.constant 0 : i32
    %c0_i32_0 = arith.constant 0 : i32
    return %arg0, %c0_i32 : i32, i32
  }
}

</mosaic_0001>

<llo_original>
// kernel: tpu_custom_call.1
$region0: #{tpu_custom_call.1}
  #allocation0 [shape = 'u32[]', space=smem, size = 0x4, offset = 0x4, fixed_abs, tag = 'smem constant byte address 0x4 - core index']
  #allocation1 [shape = 'u32[144,128]{1,0:T(1,128)}', space=vmem, size = 0x12000, scoped, tag = 'internal scratch']
  #allocation2 [shape = 'f32[1]{0:T(128)S(6)}', space=smem, size = 0x200, scoped, tag = 'scoped memory for tpu_custom_call.1']
  %s0 = inlined_call_operand.vmem [shape: f32[8,128], index: 0, kind: input, shape index: {}]
  %s1 = inlined_call_operand.vmem [shape: f32[8,128], index: 1, kind: input, shape index: {}]
  %s2 = inlined_call_operand.vmem [shape: f32[8,128], index: 2, kind: input, shape index: {}]
  %s3 = inlined_call_operand.vmem [shape: f32[4,3], index: 3, kind: input, shape index: {}]
  %s4 = inlined_call_operand.vmem [shape: f32[4], index: 4, kind: input, shape index: {}]
  %s5 = inlined_call_operand.vmem [shape: f32[512,4], index: 5, kind: input, shape index: {}]
  %s6 = inlined_call_operand.<no memory space> [shape: f32[1], index: 6, kind: input, shape index: {}]
  %s7 = inlined_call_operand.vmem [shape: f32[8,4], index: 7, kind: output, shape index: {}]
  %s8 = sld [smem:[#allocation0]]
  $region46: #{tpu_custom_call.1} parent=0
    _
  %s10 = ssub.s32 1, %s8
  %s11 = scalar_select 0, %s10, %s8
  %12 = sst [smem:[#allocation2]] %s6
  $region1: #{tpu_custom_call.1} parent=0
    #allocation3 [shape = 'u8[2048]{0}', space=smem, size = 0x800, scoped, tag = 'input window, operand 3, single buffered']
    #allocation4 [shape = 's32[1]{0}', space=sflag, size = 0x4, scoped, tag = 'scoped memory for tpu_custom_call.1']
    #allocation5 [shape = 'u8[512]{0}', space=smem, size = 0x200, scoped, tag = 'input window, operand 4, single buffered']
    #allocation6 [shape = 's32[1]{0}', space=sflag, size = 0x4, scoped, tag = 'scoped memory for tpu_custom_call.1']
    %13 = vsyncpa [#allocation4], 0
    %14 = vsyncpa [#allocation6], 0
    // Predicated region
    $region2: #{tpu_custom_call.1} parent=1 // pred_check
      _
    $region3: #{tpu_custom_call.1} parent=1 // pred_check_branch
      %16 = sbr.rel (0) target = $region5
    $region4: #{tpu_custom_call.1} parent=1 // pred_region
      _
    $region5: #{tpu_custom_call.1} parent=1 // pred_fallthru
      _
    // Predicated region
    $region6: #{tpu_custom_call.1} parent=1 // pred_check
      _
    $region7: #{tpu_custom_call.1} parent=1 // pred_check_branch
      %18 = sbr.rel (0) target = $region9
    $region8: #{tpu_custom_call.1} parent=1 // pred_region
      _
    $region9: #{tpu_custom_call.1} parent=1 // pred_fallthru
      _
    // Predicated region
    $region10: #{tpu_custom_call.1} parent=1 // pred_check
      _
    $region11: #{tpu_custom_call.1} parent=1 // pred_check_branch
      %20 = sbr.rel (0) target = $region13
    $region12: #{tpu_custom_call.1} parent=1 // pred_region
      _
    $region13: #{tpu_custom_call.1} parent=1 // pred_fallthru
      _
    // Predicated region
    $region14: #{tpu_custom_call.1} parent=1 // pred_check
      _
    $region15: #{tpu_custom_call.1} parent=1 // pred_check_branch
      %22 = sbr.rel (0) target = $region17
    $region16: #{tpu_custom_call.1} parent=1 // pred_region
      %s24 = ssub.s32 64, 64
      %25 = vsyncadd [#allocation4], %s24
      %s27 = sshll.u32 %s3, 4
      %s28 = int_to_ptr.vmem [resolvable:$true] %s27
      %30 = dma.vmem_to_smem %s28, 64, [#allocation3], [#allocation4]
    $region17: #{tpu_custom_call.1} parent=1 // pred_fallthru
      _
    // Predicated region
    $region18: #{tpu_custom_call.1} parent=1 // pred_check
      _
    $region19: #{tpu_custom_call.1} parent=1 // pred_check_branch
      %32 = sbr.rel (0) target = $region21
    $region20: #{tpu_custom_call.1} parent=1 // pred_region
      %s34 = ssub.s32 16, 16
      %35 = vsyncadd [#allocation6], %s34
      %s37 = sshll.u32 %s4, 4
      %s38 = int_to_ptr.vmem [resolvable:$true] %s37
      %40 = dma.vmem_to_smem %s38, 16, [#allocation5], [#allocation6]
    $region21: #{tpu_custom_call.1} parent=1 // pred_fallthru
      _
    // Predicated region
    $region22: #{tpu_custom_call.1} parent=1 // pred_check
      _
    $region23: #{tpu_custom_call.1} parent=1 // pred_check_branch
      %42 = sbr.rel (0) target = $region25
    $region24: #{tpu_custom_call.1} parent=1 // pred_region
      _
    $region25: #{tpu_custom_call.1} parent=1 // pred_fallthru
      _
    // Predicated region
    $region26: #{tpu_custom_call.1} parent=1 // pred_check
      _
    $region27: #{tpu_custom_call.1} parent=1 // pred_check_branch
      %44 = sbr.rel (0) target = $region29
    $region28: #{tpu_custom_call.1} parent=1 // pred_region
      _
    $region29: #{tpu_custom_call.1} parent=1 // pred_fallthru
      _
    // Predicated region
    $region30: #{tpu_custom_call.1} parent=1 // pred_check
      _
    $region31: #{tpu_custom_call.1} parent=1 // pred_check_branch
      %46 = sbr.rel (0) target = $region33
    $region32: #{tpu_custom_call.1} parent=1 // pred_region
      %47 = dma.done [#allocation4], 64
    $region33: #{tpu_custom_call.1} parent=1 // pred_fallthru
      _
    // Predicated region
    $region34: #{tpu_custom_call.1} parent=1 // pred_check
      _
    $region35: #{tpu_custom_call.1} parent=1 // pred_check_branch
      %49 = sbr.rel (0) target = $region37
    $region36: #{tpu_custom_call.1} parent=1 // pred_region
      %50 = dma.done [#allocation6], 16
    $region37: #{tpu_custom_call.1} parent=1 // pred_fallthru
      _
    %51 = sfence
    %s52 = sld [smem:[#allocation3]]
    %s53 = sld [smem:[#allocation3 + $0x80]]
    %s54 = sld [smem:[#allocation3 + $0x100]]
    %s55 = sld [smem:[#allocation3 + $0x180]]
    %s56 = sld [smem:[#allocation3 + $0x1]]
    %s57 = sld [smem:[#allocation3 + $0x81]]
    %s58 = sld [smem:[#allocation3 + $0x101]]
    %s59 = sld [smem:[#allocation3 + $0x181]]
    %s60 = sld [smem:[#allocation3 + $0x2]]
    %s61 = sld [smem:[#allocation3 + $0x82]]
    %s62 = sld [smem:[#allocation3 + $0x102]]
    %s63 = sld [smem:[#allocation3 + $0x182]]
    %s64 = sld [smem:[#allocation5]]
    %s65 = sld [smem:[#allocation5 + $0x1]]
    %s66 = sld [smem:[#allocation5 + $0x2]]
    %s67 = sld [smem:[#allocation5 + $0x3]]
    %s68 = sld [smem:[#allocation2]]
    %v69 = vld [vmem:[%s0] sm:$0xff]
    %v70 = vld [vmem:[%s1] sm:$0xff]
    %v71 = vld [vmem:[%s2] sm:$0xff]
    %v72 = vstv %s52
    %v73 = vmul.f32 %v72, %v69
    %v74 = vstv %s56
    %v75 = vmul.f32 %v74, %v70
    %v76 = vadd.f32 %v73, %v75
    %v77 = vstv %s60
    %v78 = vmul.f32 %v77, %v71
    %v79 = vadd.f32 %v76, %v78
    %v80 = vstv %s64
    %v81 = vadd.f32 %v79, %v80
    %v82 = vmax.f32 %v81, 0.0
    %v83 = vstv %s53
    %v84 = vmul.f32 %v83, %v69
    %v85 = vstv %s57
    %v86 = vmul.f32 %v85, %v70
    %v87 = vadd.f32 %v84, %v86
    %v88 = vstv %s61
    %v89 = vmul.f32 %v88, %v71
    %v90 = vadd.f32 %v87, %v89
    %v91 = vstv %s65
    %v92 = vadd.f32 %v90, %v91
    %v93 = vmax.f32 %v92, 0.0
    %v94 = vstv %s54
    %v95 = vmul.f32 %v94, %v69
    %v96 = vstv %s58
    %v97 = vmul.f32 %v96, %v70
    %v98 = vadd.f32 %v95, %v97
    %v99 = vstv %s62
    %v100 = vmul.f32 %v99, %v71
    %v101 = vadd.f32 %v98, %v100
    %v102 = vstv %s66
    %v103 = vadd.f32 %v101, %v102
    %v104 = vmax.f32 %v103, 0.0
    %v105 = vstv %s55
    %v106 = vmul.f32 %v105, %v69
    %v107 = vstv %s59
    %v108 = vmul.f32 %v107, %v70
    %v109 = vadd.f32 %v106, %v108
    %v110 = vstv %s63
    %v111 = vmul.f32 %v110, %v71
    %v112 = vadd.f32 %v109, %v111
    %v113 = vstv %s67
    %v114 = vadd.f32 %v112, %v113
    %v115 = vmax.f32 %v114, 0.0
    %v116 = vld [vmem:[%s5] sm:$0xff]
    %v117 = vld [vmem:[%s5 + $0x8] sm:$0xff]
    %v118 = vld [vmem:[%s5 + $0x10] sm:$0xff]
    %v119 = vld [vmem:[%s5 + $0x18] sm:$0xff]
    %v120 = vld [vmem:[%s5 + $0x20] sm:$0xff]
    %v121 = vld [vmem:[%s5 + $0x28] sm:$0xff]
    %v122 = vld [vmem:[%s5 + $0x30] sm:$0xff]
    %v123 = vld [vmem:[%s5 + $0x38] sm:$0xff]
    %v124 = vld [vmem:[%s5 + $0x40] sm:$0xff]
    %v125 = vld [vmem:[%s5 + $0x48] sm:$0xff]
    %v126 = vld [vmem:[%s5 + $0x50] sm:$0xff]
    %v127 = vld [vmem:[%s5 + $0x58] sm:$0xff]
    %v128 = vld [vmem:[%s5 + $0x60] sm:$0xff]
    %v129 = vld [vmem:[%s5 + $0x68] sm:$0xff]
    %v130 = vld [vmem:[%s5 + $0x70] sm:$0xff]
    %v131 = vld [vmem:[%s5 + $0x78] sm:$0xff]
    %v132 = vld [vmem:[%s5 + $0x80] sm:$0xff]
    %v133 = vld [vmem:[%s5 + $0x88] sm:$0xff]
    %v134 = vld [vmem:[%s5 + $0x90] sm:$0xff]
    %v135 = vld [vmem:[%s5 + $0x98] sm:$0xff]
    %v136 = vld [vmem:[%s5 + $0xa0] sm:$0xff]
    %v137 = vld [vmem:[%s5 + $0xa8] sm:$0xff]
    %v138 = vld [vmem:[%s5 + $0xb0] sm:$0xff]
    %v139 = vld [vmem:[%s5 + $0xb8] sm:$0xff]
    %v140 = vld [vmem:[%s5 + $0xc0] sm:$0xff]
    %v141 = vld [vmem:[%s5 + $0xc8] sm:$0xff]
    %v142 = vld [vmem:[%s5 + $0xd0] sm:$0xff]
    %v143 = vld [vmem:[%s5 + $0xd8] sm:$0xff]
    %v144 = vld [vmem:[%s5 + $0xe0] sm:$0xff]
    %v145 = vld [vmem:[%s5 + $0xe8] sm:$0xff]
    %v146 = vld [vmem:[%s5 + $0xf0] sm:$0xff]
    %v147 = vld [vmem:[%s5 + $0xf8] sm:$0xff]
    %v148 = vld [vmem:[%s5 + $0x100] sm:$0xff]
    %v149 = vld [vmem:[%s5 + $0x108] sm:$0xff]
    %v150 = vld [vmem:[%s5 + $0x110] sm:$0xff]
    %v151 = vld [vmem:[%s5 + $0x118] sm:$0xff]
    %v152 = vld [vmem:[%s5 + $0x120] sm:$0xff]
    %v153 = vld [vmem:[%s5 + $0x128] sm:$0xff]
    %v154 = vld [vmem:[%s5 + $0x130] sm:$0xff]
    %v155 = vld [vmem:[%s5 + $0x138] sm:$0xff]
    %v156 = vld [vmem:[%s5 + $0x140] sm:$0xff]
    %v157 = vld [vmem:[%s5 + $0x148] sm:$0xff]
    %v158 = vld [vmem:[%s5 + $0x150] sm:$0xff]
    %v159 = vld [vmem:[%s5 + $0x158] sm:$0xff]
    %v160 = vld [vmem:[%s5 + $0x160] sm:$0xff]
    %v161 = vld [vmem:[%s5 + $0x168] sm:$0xff]
    %v162 = vld [vmem:[%s5 + $0x170] sm:$0xff]
    %v163 = vld [vmem:[%s5 + $0x178] sm:$0xff]
    %v164 = vld [vmem:[%s5 + $0x180] sm:$0xff]
    %v165 = vld [vmem:[%s5 + $0x188] sm:$0xff]
    %v166 = vld [vmem:[%s5 + $0x190] sm:$0xff]
    %v167 = vld [vmem:[%s5 + $0x198] sm:$0xff]
    %v168 = vld [vmem:[%s5 + $0x1a0] sm:$0xff]
    %v169 = vld [vmem:[%s5 + $0x1a8] sm:$0xff]
    %v170 = vld [vmem:[%s5 + $0x1b0] sm:$0xff]
    %v171 = vld [vmem:[%s5 + $0x1b8] sm:$0xff]
    %v172 = vld [vmem:[%s5 + $0x1c0] sm:$0xff]
    %v173 = vld [vmem:[%s5 + $0x1c8] sm:$0xff]
    %v174 = vld [vmem:[%s5 + $0x1d0] sm:$0xff]
    %v175 = vld [vmem:[%s5 + $0x1d8] sm:$0xff]
    %v176 = vld [vmem:[%s5 + $0x1e0] sm:$0xff]
    %v177 = vld [vmem:[%s5 + $0x1e8] sm:$0xff]
    %v178 = vld [vmem:[%s5 + $0x1f0] sm:$0xff]
    %v179 = vld [vmem:[%s5 + $0x1f8] sm:$0xff]
    %v180 = vstv %s68
    %181 = vmatprep.subr.mxu0 0.0
    %182 = vmatpush1.msra.mxu0 %v116
    %183 = vmatprep.subr.mxu0 0.0
    %184 = vmatpush1.msra.mxu0 %v117
    %185 = vmatprep.subr.mxu0 0.0
    %186 = vmatpush1.msra.mxu0 %v118
    %187 = vmatprep.subr.mxu0 0.0
    %188 = vmatpush1.msra.mxu0 %v119
    %189 = vmatprep.subr.mxu0 0.0
    %190 = vmatpush1.msra.mxu0 %v120
    %191 = vmatprep.subr.mxu0 0.0
    %192 = vmatpush1.msra.mxu0 %v121
    %193 = vmatprep.subr.mxu0 0.0
    %194 = vmatpush1.msra.mxu0 %v122
    %195 = vmatprep.subr.mxu0 0.0
    %196 = vmatpush1.msra.mxu0 %v123
    %197 = vmatprep.subr.mxu0 0.0
    %198 = vmatpush1.msra.mxu0 %v124
    %199 = vmatprep.subr.mxu0 0.0
    %200 = vmatpush1.msra.mxu0 %v125
    %201 = vmatprep.subr.mxu0 0.0
    %202 = vmatpush1.msra.mxu0 %v126
    %203 = vmatprep.subr.mxu0 0.0
    %204 = vmatpush1.msra.mxu0 %v127
    %205 = vmatprep.subr.mxu0 0.0
    %206 = vmatpush1.msra.mxu0 %v128
    %207 = vmatprep.subr.mxu0 0.0
    %208 = vmatpush1.msra.mxu0 %v129
    %209 = vmatprep.subr.mxu0 0.0
    %210 = vmatpush1.msra.mxu0 %v130
    %211 = vmatprep.subr.mxu0 0.0
    %212 = vmatpush1.msra.mxu0 %v131
    %213 = vmatprep.subr.mxu0 0.0
    %214 = vmatpush1.msra.mxu0 %v132
    %215 = vmatprep.subr.mxu0 0.0
    %216 = vmatpush1.msra.mxu0 %v133
    %217 = vmatprep.subr.mxu0 0.0
    %218 = vmatpush1.msra.mxu0 %v134
    %219 = vmatprep.subr.mxu0 0.0
    %220 = vmatpush1.msra.mxu0 %v135
    %221 = vmatprep.subr.mxu0 0.0
    %222 = vmatpush1.msra.mxu0 %v136
    %223 = vmatprep.subr.mxu0 0.0
    %224 = vmatpush1.msra.mxu0 %v137
    %225 = vmatprep.subr.mxu0 0.0
    %226 = vmatpush1.msra.mxu0 %v138
    %227 = vmatprep.subr.mxu0 0.0
    %228 = vmatpush1.msra.mxu0 %v139
    %229 = vmatprep.subr.mxu0 0.0
    %230 = vmatpush1.msra.mxu0 %v140
    %231 = vmatprep.subr.mxu0 0.0
    %232 = vmatpush1.msra.mxu0 %v141
    %233 = vmatprep.subr.mxu0 0.0
    %234 = vmatpush1.msra.mxu0 %v142
    %235 = vmatprep.subr.mxu0 0.0
    %236 = vmatpush1.msra.mxu0 %v143
    %237 = vmatprep.subr.mxu0 0.0
    %238 = vmatpush1.msra.mxu0 %v144
    %239 = vmatprep.subr.mxu0 0.0
    %240 = vmatpush1.msra.mxu0 %v145
    %241 = vmatprep.subr.mxu0 0.0
    %242 = vmatpush1.msra.mxu0 %v146
    %243 = vmatprep.subr.mxu0 0.0
    %244 = vmatpush1.msra.mxu0 %v147
    %245 = vmatprep.mubr.f32.mxu0 %v93
    %246 = vmatmul.mubr.f32.gmra.mrb[0].mxu0 %v82
    %v247 = vpop.f32.mrb[0].mxu0
    %v248 = vadd.f32 %v180, %v247
    %v249 = vpop.f32.mrb[0].mxu0
    %250 = vdwg.mxu0
    %251 = vmatprep.subr.mxu0 0.0
    %252 = vmatpush1.msra.mxu0 %v148
    %253 = vmatprep.subr.mxu0 0.0
    %254 = vmatpush1.msra.mxu0 %v149
    %255 = vmatprep.subr.mxu0 0.0
    %256 = vmatpush1.msra.mxu0 %v150
    %257 = vmatprep.subr.mxu0 0.0
    %258 = vmatpush1.msra.mxu0 %v151
    %259 = vmatprep.subr.mxu0 0.0
    %260 = vmatpush1.msra.mxu0 %v152
    %261 = vmatprep.subr.mxu0 0.0
    %262 = vmatpush1.msra.mxu0 %v153
    %263 = vmatprep.subr.mxu0 0.0
    %264 = vmatpush1.msra.mxu0 %v154
    %265 = vmatprep.subr.mxu0 0.0
    %266 = vmatpush1.msra.mxu0 %v155
    %267 = vmatprep.subr.mxu0 0.0
    %268 = vmatpush1.msra.mxu0 %v156
    %269 = vmatprep.subr.mxu0 0.0
    %270 = vmatpush1.msra.mxu0 %v157
    %271 = vmatprep.subr.mxu0 0.0
    %272 = vmatpush1.msra.mxu0 %v158
    %273 = vmatprep.subr.mxu0 0.0
    %274 = vmatpush1.msra.mxu0 %v159
    %275 = vmatprep.subr.mxu0 0.0
    %276 = vmatpush1.msra.mxu0 %v160
    %277 = vmatprep.subr.mxu0 0.0
    %278 = vmatpush1.msra.mxu0 %v161
    %279 = vmatprep.subr.mxu0 0.0
    %280 = vmatpush1.msra.mxu0 %v162
    %281 = vmatprep.subr.mxu0 0.0
    %282 = vmatpush1.msra.mxu0 %v163
    %283 = vmatprep.subr.mxu0 0.0
    %284 = vmatpush1.msra.mxu0 %v164
    %285 = vmatprep.subr.mxu0 0.0
    %286 = vmatpush1.msra.mxu0 %v165
    %287 = vmatprep.subr.mxu0 0.0
    %288 = vmatpush1.msra.mxu0 %v166
    %289 = vmatprep.subr.mxu0 0.0
    %290 = vmatpush1.msra.mxu0 %v167
    %291 = vmatprep.subr.mxu0 0.0
    %292 = vmatpush1.msra.mxu0 %v168
    %293 = vmatprep.subr.mxu0 0.0
    %294 = vmatpush1.msra.mxu0 %v169
    %295 = vmatprep.subr.mxu0 0.0
    %296 = vmatpush1.msra.mxu0 %v170
    %297 = vmatprep.subr.mxu0 0.0
    %298 = vmatpush1.msra.mxu0 %v171
    %299 = vmatprep.subr.mxu0 0.0
    %300 = vmatpush1.msra.mxu0 %v172
    %301 = vmatprep.subr.mxu0 0.0
    %302 = vmatpush1.msra.mxu0 %v173
    %303 = vmatprep.subr.mxu0 0.0
    %304 = vmatpush1.msra.mxu0 %v174
    %305 = vmatprep.subr.mxu0 0.0
    %306 = vmatpush1.msra.mxu0 %v175
    %307 = vmatprep.subr.mxu0 0.0
    %308 = vmatpush1.msra.mxu0 %v176
    %309 = vmatprep.subr.mxu0 0.0
    %310 = vmatpush1.msra.mxu0 %v177
    %311 = vmatprep.subr.mxu0 0.0
    %312 = vmatpush1.msra.mxu0 %v178
    %313 = vmatprep.subr.mxu0 0.0
    %314 = vmatpush1.msra.mxu0 %v179
    %315 = vmatprep.mubr.f32.mxu0 %v115
    %316 = vmatmul.mubr.f32.gmra.mrb[0].mxu0 %v104
    %v317 = vpop.f32.mrb[0].mxu0
    %v318 = vadd.f32 %v248, %v317
    %v319 = vpop.f32.mrb[0].mxu0
    %320 = vdwg.mxu0
    %vm321 = vcmask 31744
    %322 = vst.msk [vmem:[%s7] sm:$0xff] %vm321, %v318
    // Predicated region
    $region38: #{tpu_custom_call.1} parent=1 // pred_check
      _
    $region39: #{tpu_custom_call.1} parent=1 // pred_check_branch
      %324 = sbr.rel (0) target = $region41
    $region40: #{tpu_custom_call.1} parent=1 // pred_region
      _
    $region41: #{tpu_custom_call.1} parent=1 // pred_fallthru
      _
    // Predicated region
    $region42: #{tpu_custom_call.1} parent=1 // pred_check
      _
    $region43: #{tpu_custom_call.1} parent=1 // pred_check_branch
      %326 = sbr.rel (0) target = $region45
    $region44: #{tpu_custom_call.1} parent=1 // pred_region
      _
    $region45: #{tpu_custom_call.1} parent=1 // pred_fallthru
      _
    %327 = vsyncpa [#allocation4], 1
    %328 = vsyncpa [#allocation6], 1

</llo_original>
